<compile_context>
chip_gen: v7x
topology: tpu7x:2x2x1
jax: 0.10.0
libtpu: 0.0.40
codegen_flags: <defaults>
</compile_context>

<pallas_src>
import numpy as np
import jax
import jax.numpy as jnp
from jax.experimental import pallas as pl
from jax.experimental.pallas import tpu as pltpu

_HALF_PI = float(np.pi * 0.5)


def _round_up(x, m):
    return ((x + m - 1) // m) * m


def make_positional_encoding(num_freqs=6, d_in=3, freq_factor=float(np.pi),
                             include_input=True, batch_tile=2048):
    """Returns (apply_fn, d_out). apply_fn(x: (B, d_in) f32) -> (B, d_out) f32."""
    # Python-scalar frequencies only: baked into the kernel as scalar consts.
    freqs = [float(freq_factor * (2.0 ** i)) for i in range(num_freqs)]
    two_f = 2 * num_freqs

    use_input = include_input and d_in > 1
    d_out = two_f * d_in + (d_in if use_input else 0)   # width forward() produces
    base = d_in if use_input else 0

    def pe_kernel(xt_ref, o_ref):
        x = xt_ref[...]                                  # (d_in, TB), lanes = batch
        if use_input:
            o_ref[pl.ds(0, d_in), :] = x
        # Unrolled over frequencies; only scalar constants, full-lane stores.
        for i, f in enumerate(freqs):
            fx = x * f
            o_ref[pl.ds(base + (2 * i) * d_in, d_in), :] = jnp.sin(fx)
            o_ref[pl.ds(base + (2 * i + 1) * d_in, d_in), :] = jnp.sin(fx + _HALF_PI)

    def apply(x):
        assert x.ndim == 2 and x.shape[1] == d_in
        B = x.shape[0]
        bt = _round_up(batch_tile, 128)                  # lane tile: multiple of 128
        tb = min(bt, _round_up(max(B, 1), 128))
        B_pad = _round_up(B, tb)                         # pad, never assert

        xt = jnp.transpose(x)                            # (d_in, B) — batch on lanes
        if B_pad != B:
            xt = jnp.pad(xt, ((0, 0), (0, B_pad - B)))

        cost = pl.CostEstimate(
            flops=2 * B_pad * two_f * d_in,
            transcendentals=B_pad * two_f * d_in,
            bytes_accessed=4 * B_pad * (d_in + d_out),
        )

        out = pl.pallas_call(
            pe_kernel,
            out_shape=jax.ShapeDtypeStruct((d_out, B_pad), x.dtype),
            grid=(B_pad // tb,),
            in_specs=[pl.BlockSpec((d_in, tb), lambda i: (0, i))],
            out_specs=pl.BlockSpec((d_out, tb), lambda i: (0, i)),
            compiler_params=pltpu.CompilerParams(
                dimension_semantics=("parallel",)),
            cost_estimate=cost,
        )(xt)

        # Layout plumbing back to the PyTorch (B, d_out) shape.
        return out[:, :B].T

    return apply, d_out


def _reference(x, num_freqs=6, freq_factor=float(np.pi), include_input=True):
    """Pure-JAX mirror of the PyTorch forward."""
    d_in = x.shape[1]
    freqs = freq_factor * (2.0 ** jnp.arange(num_freqs, dtype=jnp.float32))
    freqs_rep = jnp.repeat(freqs, 2).reshape(1, -1, 1)
    phases = jnp.zeros(2 * num_freqs, jnp.float32).at[1::2].set(jnp.pi * 0.5)
    phases = phases.reshape(1, -1, 1)
    embed = jnp.tile(x[:, None, :], (1, num_freqs * 2, 1))
    embed = jnp.sin(phases + embed * freqs_rep)
    embed = embed.reshape(x.shape[0], -1)
    if include_input and d_in > 1:
        embed = jnp.concatenate([x, embed], axis=-1)
    return embed


if __name__ == "__main__":
    num_freqs, d_in = 6, 3
    apply_fn, d_out = make_positional_encoding(num_freqs=num_freqs, d_in=d_in)

    # Case 1: small batch (pads up to one 128-wide lane tile).
    x1 = jax.random.normal(jax.random.PRNGKey(0), (16, d_in), dtype=jnp.float32)
    out1 = apply_fn(x1)
    jax.block_until_ready(out1)
    assert out1.shape == (16, d_out), (out1.shape, d_out)
    ref1 = _reference(x1, num_freqs=num_freqs)
    # sin may run on the EUP inside the kernel; allow transcendental slack.
    np.testing.assert_allclose(np.asarray(out1), np.asarray(ref1),
                               rtol=5e-4, atol=5e-4)

    # Case 2: batch not a multiple of the tile — exercises padding + slice-back.
    x2 = jax.random.normal(jax.random.PRNGKey(1), (13, d_in), dtype=jnp.float32)
    out2 = apply_fn(x2)
    jax.block_until_ready(out2)
    assert out2.shape == (13, d_out), (out2.shape, d_out)
    ref2 = _reference(x2, num_freqs=num_freqs)
    np.testing.assert_allclose(np.asarray(out2), np.asarray(ref2),
                               rtol=5e-4, atol=5e-4)

    print("KERNEL_OK")
</pallas_src>

<mosaic_0001>
module attributes {stable_mosaic.version = 11 : i64} {
  func.func @pe_kernel(%arg0: i32, %arg1: memref<3x128xf32, #tpu.memory_space<vmem>>, %arg2: memref<39x128xf32, #tpu.memory_space<vmem>>) attributes {dimension_semantics = [#tpu.dimension_semantics<parallel>], iteration_bounds = array<i64: 1>, scalar_prefetch = 0 : i64, scratch_operands = 0 : i64, tpu.core_type = #tpu.core_type<tc>, window_params = [{transform_indices = @transform_0, window_bounds = array<i64: 3, 128>}, {transform_indices = @transform_1, window_bounds = array<i64: 39, 128>}]} {
    %c0 = arith.constant 0 : index
    %c0_0 = arith.constant 0 : index
    %0 = vector.load %arg1[%c0, %c0_0] : memref<3x128xf32, #tpu.memory_space<vmem>>, vector<3x128xf32>
    %c0_1 = arith.constant 0 : index
    %c0_2 = arith.constant 0 : index
    %1 = vector.load %arg2[%c0_1, %c0_2] : memref<39x128xf32, #tpu.memory_space<vmem>>, vector<3x128xf32>
    tpu.vector_store %arg2[%c0_1, %c0_2], %0 {strides = array<i32>} : memref<39x128xf32, #tpu.memory_space<vmem>>, vector<3x128xf32>,
    %cst = arith.constant 3.14159274 : f32
    %2 = vector.broadcast %cst : f32 to vector<3x128xf32>
    %3 = arith.mulf %0, %2 : vector<3x128xf32>
    %4 = math.sin %3 : vector<3x128xf32>
    %c3 = arith.constant 3 : index
    %c0_3 = arith.constant 0 : index
    %5 = vector.load %arg2[%c3, %c0_3] : memref<39x128xf32, #tpu.memory_space<vmem>>, vector<3x128xf32>
    tpu.vector_store %arg2[%c3, %c0_3], %4 {strides = array<i32>} : memref<39x128xf32, #tpu.memory_space<vmem>>, vector<3x128xf32>,
    %cst_4 = arith.constant 1.57079637 : f32
    %6 = vector.broadcast %cst_4 : f32 to vector<3x128xf32>
    %7 = arith.addf %3, %6 : vector<3x128xf32>
    %8 = math.sin %7 : vector<3x128xf32>
    %c6 = arith.constant 6 : index
    %c0_5 = arith.constant 0 : index
    %9 = vector.load %arg2[%c6, %c0_5] : memref<39x128xf32, #tpu.memory_space<vmem>>, vector<3x128xf32>
    tpu.vector_store %arg2[%c6, %c0_5], %8 {strides = array<i32>} : memref<39x128xf32, #tpu.memory_space<vmem>>, vector<3x128xf32>,
    %cst_6 = arith.constant 6.28318548 : f32
    %10 = vector.broadcast %cst_6 : f32 to vector<3x128xf32>
    %11 = arith.mulf %0, %10 : vector<3x128xf32>
    %12 = math.sin %11 : vector<3x128xf32>
    %c9 = arith.constant 9 : index
    %c0_7 = arith.constant 0 : index
    %13 = vector.load %arg2[%c9, %c0_7] : memref<39x128xf32, #tpu.memory_space<vmem>>, vector<3x128xf32>
    tpu.vector_store %arg2[%c9, %c0_7], %12 {strides = array<i32>} : memref<39x128xf32, #tpu.memory_space<vmem>>, vector<3x128xf32>,
    %cst_8 = arith.constant 1.57079637 : f32
    %14 = vector.broadcast %cst_8 : f32 to vector<3x128xf32>
    %15 = arith.addf %11, %14 : vector<3x128xf32>
    %16 = math.sin %15 : vector<3x128xf32>
    %c12 = arith.constant 12 : index
    %c0_9 = arith.constant 0 : index
    %17 = vector.load %arg2[%c12, %c0_9] : memref<39x128xf32, #tpu.memory_space<vmem>>, vector<3x128xf32>
    tpu.vector_store %arg2[%c12, %c0_9], %16 {strides = array<i32>} : memref<39x128xf32, #tpu.memory_space<vmem>>, vector<3x128xf32>,
    %cst_10 = arith.constant 12.566371 : f32
    %18 = vector.broadcast %cst_10 : f32 to vector<3x128xf32>
    %19 = arith.mulf %0, %18 : vector<3x128xf32>
    %20 = math.sin %19 : vector<3x128xf32>
    %c15 = arith.constant 15 : index
    %c0_11 = arith.constant 0 : index
    %21 = vector.load %arg2[%c15, %c0_11] : memref<39x128xf32, #tpu.memory_space<vmem>>, vector<3x128xf32>
    tpu.vector_store %arg2[%c15, %c0_11], %20 {strides = array<i32>} : memref<39x128xf32, #tpu.memory_space<vmem>>, vector<3x128xf32>,
    %cst_12 = arith.constant 1.57079637 : f32
    %22 = vector.broadcast %cst_12 : f32 to vector<3x128xf32>
    %23 = arith.addf %19, %22 : vector<3x128xf32>
    %24 = math.sin %23 : vector<3x128xf32>
    %c18 = arith.constant 18 : index
    %c0_13 = arith.constant 0 : index
    %25 = vector.load %arg2[%c18, %c0_13] : memref<39x128xf32, #tpu.memory_space<vmem>>, vector<3x128xf32>
    tpu.vector_store %arg2[%c18, %c0_13], %24 {strides = array<i32>} : memref<39x128xf32, #tpu.memory_space<vmem>>, vector<3x128xf32>,
    %cst_14 = arith.constant 25.1327419 : f32
    %26 = vector.broadcast %cst_14 : f32 to vector<3x128xf32>
    %27 = arith.mulf %0, %26 : vector<3x128xf32>
    %28 = math.sin %27 : vector<3x128xf32>
    %c21 = arith.constant 21 : index
    %c0_15 = arith.constant 0 : index
    %29 = vector.load %arg2[%c21, %c0_15] : memref<39x128xf32, #tpu.memory_space<vmem>>, vector<3x128xf32>
    tpu.vector_store %arg2[%c21, %c0_15], %28 {strides = array<i32>} : memref<39x128xf32, #tpu.memory_space<vmem>>, vector<3x128xf32>,
    %cst_16 = arith.constant 1.57079637 : f32
    %30 = vector.broadcast %cst_16 : f32 to vector<3x128xf32>
    %31 = arith.addf %27, %30 : vector<3x128xf32>
    %32 = math.sin %31 : vector<3x128xf32>
    %c24 = arith.constant 24 : index
    %c0_17 = arith.constant 0 : index
    %33 = vector.load %arg2[%c24, %c0_17] : memref<39x128xf32, #tpu.memory_space<vmem>>, vector<3x128xf32>
    tpu.vector_store %arg2[%c24, %c0_17], %32 {strides = array<i32>} : memref<39x128xf32, #tpu.memory_space<vmem>>, vector<3x128xf32>,
    %cst_18 = arith.constant 50.2654839 : f32
    %34 = vector.broadcast %cst_18 : f32 to vector<3x128xf32>
    %35 = arith.mulf %0, %34 : vector<3x128xf32>
    %36 = math.sin %35 : vector<3x128xf32>
    %c27 = arith.constant 27 : index
    %c0_19 = arith.constant 0 : index
    %37 = vector.load %arg2[%c27, %c0_19] : memref<39x128xf32, #tpu.memory_space<vmem>>, vector<3x128xf32>
    tpu.vector_store %arg2[%c27, %c0_19], %36 {strides = array<i32>} : memref<39x128xf32, #tpu.memory_space<vmem>>, vector<3x128xf32>,
    %cst_20 = arith.constant 1.57079637 : f32
    %38 = vector.broadcast %cst_20 : f32 to vector<3x128xf32>
    %39 = arith.addf %35, %38 : vector<3x128xf32>
    %40 = math.sin %39 : vector<3x128xf32>
    %c30 = arith.constant 30 : index
    %c0_21 = arith.constant 0 : index
    %41 = vector.load %arg2[%c30, %c0_21] : memref<39x128xf32, #tpu.memory_space<vmem>>, vector<3x128xf32>
    tpu.vector_store %arg2[%c30, %c0_21], %40 {strides = array<i32>} : memref<39x128xf32, #tpu.memory_space<vmem>>, vector<3x128xf32>,
    %cst_22 = arith.constant 100.530968 : f32
    %42 = vector.broadcast %cst_22 : f32 to vector<3x128xf32>
    %43 = arith.mulf %0, %42 : vector<3x128xf32>
    %44 = math.sin %43 : vector<3x128xf32>
    %c33 = arith.constant 33 : index
    %c0_23 = arith.constant 0 : index
    %45 = vector.load %arg2[%c33, %c0_23] : memref<39x128xf32, #tpu.memory_space<vmem>>, vector<3x128xf32>
    tpu.vector_store %arg2[%c33, %c0_23], %44 {strides = array<i32>} : memref<39x128xf32, #tpu.memory_space<vmem>>, vector<3x128xf32>,
    %cst_24 = arith.constant 1.57079637 : f32
    %46 = vector.broadcast %cst_24 : f32 to vector<3x128xf32>
    %47 = arith.addf %43, %46 : vector<3x128xf32>
    %48 = math.sin %47 : vector<3x128xf32>
    %c36 = arith.constant 36 : index
    %c0_25 = arith.constant 0 : index
    %49 = vector.load %arg2[%c36, %c0_25] : memref<39x128xf32, #tpu.memory_space<vmem>>, vector<3x128xf32>
    tpu.vector_store %arg2[%c36, %c0_25], %48 {strides = array<i32>} : memref<39x128xf32, #tpu.memory_space<vmem>>, vector<3x128xf32>,
    return
  }
  func.func @transform_0(%arg0: i32) -> (i32, i32) {
    %c0_i32 = arith.constant 0 : i32
    %c0_i32_0 = arith.constant 0 : i32
    return %c0_i32, %arg0 : i32, i32
  }
  func.func @transform_1(%arg0: i32) -> (i32, i32) {
    %c0_i32 = arith.constant 0 : i32
    %c0_i32_0 = arith.constant 0 : i32
    return %c0_i32, %arg0 : i32, i32
  }
}

</mosaic_0001>

<llo_original>
// kernel: tpu_custom_call.1
$region0: #{tpu_custom_call.1}
  #allocation0 [shape = 'u32[]', space=smem, size = 0x4, offset = 0x4, fixed_abs, tag = 'smem constant byte address 0x4 - core index']
  #allocation1 [shape = 'u32[144,128]{1,0:T(1,128)}', space=vmem, size = 0x12000, scoped, tag = 'internal scratch']
  %s0 = inlined_call_operand.hbm [shape: f32[3,128], index: 0, kind: input, shape index: {}]
  %s1 = inlined_call_operand.hbm [shape: f32[39,128], index: 1, kind: output, shape index: {}]
  %s2 = sld [smem:[#allocation0]]
  $region18: #{tpu_custom_call.1} parent=0
    _
  %s4 = ssub.s32 1, %s2
  %s5 = scalar_select 0, %s4, %s2
  $region1: #{tpu_custom_call.1} parent=0
    #allocation2 [shape = 'u8[2048]{0}', space=vmem, size = 0x800, scoped, tag = 'input window, operand 0, single buffered']
    #allocation3 [shape = 's32[1]{0}', space=sflag, size = 0x4, scoped, tag = 'scoped memory for tpu_custom_call.1']
    #allocation4 [shape = 's32[1]{0}', space=sflag, size = 0x4, scoped, tag = 'scoped memory for tpu_custom_call.1']
    #allocation5 [shape = 'u8[20480]{0}', space=vmem, size = 0x5000, scoped, tag = 'output window, operand 0, single buffered']
    %6 = vsyncpa [#allocation3], 0
    %7 = vsyncpa [#allocation4], 0
    // Predicated region
    $region2: #{tpu_custom_call.1} parent=1 // pred_check
      _
    $region3: #{tpu_custom_call.1} parent=1 // pred_check_branch
      %9 = sbr.rel (0) target = $region5
    $region4: #{tpu_custom_call.1} parent=1 // pred_region
      %s11 = ssub.s32 64, 64
      %12 = vsyncadd [#allocation3], %s11
      %s14 = sshll.u32 [#allocation2], 4
      %s15 = int_to_ptr.vmem [resolvable:$true] %s14
      %17 = dma.hbm_to_vmem [thread:$0]  %s0, 64, %s15, [#allocation3]
    $region5: #{tpu_custom_call.1} parent=1 // pred_fallthru
      _
    // Predicated region
    $region6: #{tpu_custom_call.1} parent=1 // pred_check
      _
    $region7: #{tpu_custom_call.1} parent=1 // pred_check_branch
      %19 = sbr.rel (0) target = $region9
    $region8: #{tpu_custom_call.1} parent=1 // pred_region
      %20 = dma.done [#allocation3], 64
    $region9: #{tpu_custom_call.1} parent=1 // pred_fallthru
      _
    %v21 = vld [vmem:[#allocation2] sm:$0x7]
    %22 = vst [vmem:[#allocation5] sm:$0x7] %v21
    %v23 = vmul.f32 %v21, 3.1415927
    %v24 = vand.u32 2147483647, %v23
    %vm25 = vcmp.le.f32.partialorder %v24, 0.7853982
    %vm26 = vcmp.lt.s32.totalorder %v23, 0
    %v27 = vand.u32 %v23, 2139095040
    %v28 = vshrl.u32 %v27, 23
    %v29 = vsub.s32 %v28, 127
    %v30 = vand.u32 2147483647, %v23
    %v31 = vand.u32 %v30, 8388607
    %v32 = vor.u32 %v31, 8388608
    %v33 = vsub.s32 0, %v32
    %v34 = vadd.s32 %v29, 1
    %vm35 = vcmp.gt.s32.totalorder %v34, 0
    %v36 = vsel %vm35, %v34, 0
    %v37 = vshrl.u32 %v36, 5
    %v38 = vand.u32 %v36, 31
    %v39 = vsub.s32 32, %v38
    %v40 = vshrl.u32 683565275, %v39
    %v41 = vshll.u32 683565275, %v38
    %v42 = vshrl.u32 2475754826, %v39
    %v43 = vor.u32 %v41, %v42
    %v44 = vshll.u32 2475754826, %v38
    %v45 = vshrl.u32 2131351028, %v39
    %v46 = vor.u32 %v44, %v45
    %v47 = vshll.u32 2131351028, %v38
    %v48 = vshrl.u32 2102212464, %v39
    %v49 = vor.u32 %v47, %v48
    %v50 = vshll.u32 2102212464, %v38
    %v51 = vshrl.u32 920167782, %v39
    %v52 = vor.u32 %v50, %v51
    %v53 = vshll.u32 920167782, %v38
    %v54 = vshrl.u32 1326507024, %v39
    %v55 = vor.u32 %v53, %v54
    %vm56 = vcmp.lt.s32.totalorder %v37, 1
    %vm57 = vcmp.lt.s32.totalorder %v37, 2
    %vm58 = vcmp.lt.s32.totalorder %v37, 3
    %vm59 = vcmp.lt.s32.totalorder %v37, 4
    %v60 = vsel %vm56, %v40, %v43
    %v61 = vsel %vm59, %v49, 2102212464
    %v62 = vsel %vm58, %v46, %v61
    %v63 = vsel %vm57, %v60, %v62
    %v64 = vsel %vm56, %v43, %v46
    %v65 = vsel %vm59, %v52, 920167782
    %v66 = vsel %vm58, %v49, %v65
    %v67 = vsel %vm57, %v64, %v66
    %v68 = vsel %vm56, %v46, %v49
    %v69 = vsel %vm59, %v55, 1326507024
    %v70 = vsel %vm58, %v52, %v69
    %v71 = vsel %vm57, %v68, %v70
    %v72 = vshll.u32 %v32, 8
    %v73 = vmul.u32.u64.compose %v72, %v71
    %v74 = vextract.low.u32 %v73
    %v75 = vextract.high.u32 %v73
    %v76 = vmul.u32.u64.compose %v72, %v67
    %v77 = vextract.low.u32 %v76
    %v78 = vextract.high.u32 %v76
    %v79 = vmul.u32 %v72, %v63
    %v80 = vadd.s32 %v75, %v77
    %vm81 = vc.u32 %v75, %v77
    %v82 = vadd.s32 %v78, 1
    %v83 = vsel %vm81, %v82, %v78
    %v84 = vadd.s32 %v79, %v83
    %v85 = vadd.s32 %v84, 536870912
    %v86 = vshrl.u32 %v85, 30
    %v87 = vshll.u32 %v86, 30
    %v88 = vsub.s32 %v84, %v87
    %vm89 = vcmp.lt.s32.totalorder %v88, 0
    %v90 = vsub.s32 0, %v88
    %v91 = vsel %vm89, %v90, %v88
    %v92 = vclz %v91
    %v93 = vsub.s32 %v92, 2
    %vm94 = vcmp.gt.s32.totalorder 0, %v93
    %v95 = vsel %vm94, 0, %v93
    %v96 = vsub.s32 32, %v95
    %v97 = vshll.u32 %v88, %v95
    %v98 = vshrl.u32 %v80, %v96
    %v99 = vor.u32 %v97, %v98
    %v100 = vsub.s32 4294967266, %v95
    %v101 = vadd.s32 %v100, 127
    %v102 = vshll.u32 %v101, 23
    %v103 = vor.u32 4788187, %v102
    %v104 = vand.u32 2147483647, %v103
    %v106 = vcvt.s32.f32 %v99
    %v107 = vmul.f32 %v106, %v104
    %v108 = vxor.u32 %v107, 2147483648
    %v109 = vsel %vm26, %v108, %v107
    %v110 = vsub.s32 4, %v86
    %v111 = vsel %vm26, %v110, %v86
    %v112 = vsel %vm25, %v23, %v109
    %v113 = vsel %vm25, 0, %v111
    %v114 = vcosq.f32.pop %v112
    %v115 = vsinq.f32.pop %v112
    %vm116 = vweird.f32 %v23
    %v117 = vadd.s32 %v113, 3
    %v118 = vand.u32 %v117, 3
    %vm119 = vcmp.lt.s32.totalorder %v118, 2
    %vm120 = vcmp.eq.s32.totalorder %v118, 0
    %v121 = vxor.u32 %v115, 2147483648
    %v122 = vsel %vm120, %v114, %v121
    %vm123 = vcmp.eq.s32.totalorder %v118, 2
    %v124 = vxor.u32 %v114, 2147483648
    %v125 = vsel %vm123, %v124, %v115
    %v126 = vsel %vm119, %v122, %v125
    %v127 = vsel %vm116, nan, %v126
    %128 = vst [vmem:[#allocation5 + $0x3] sm:$0x7] %v127
    %v129 = vadd.f32 %v23, 1.5707964
    %v130 = vand.u32 2147483647, %v129
    %vm131 = vcmp.le.f32.partialorder %v130, 0.7853982
    %vm132 = vcmp.lt.s32.totalorder %v129, 0
    %v133 = vand.u32 %v129, 2139095040
    %v134 = vshrl.u32 %v133, 23
    %v135 = vsub.s32 %v134, 127
    %v136 = vand.u32 2147483647, %v129
    %v137 = vand.u32 %v136, 8388607
    %v138 = vor.u32 %v137, 8388608
    %v139 = vsub.s32 0, %v138
    %v140 = vadd.s32 %v135, 1
    %vm141 = vcmp.gt.s32.totalorder %v140, 0
    %v142 = vsel %vm141, %v140, 0
    %v143 = vshrl.u32 %v142, 5
    %v144 = vand.u32 %v142, 31
    %v145 = vsub.s32 32, %v144
    %v146 = vshrl.u32 683565275, %v145
    %v147 = vshll.u32 683565275, %v144
    %v148 = vshrl.u32 2475754826, %v145
    %v149 = vor.u32 %v147, %v148
    %v150 = vshll.u32 2475754826, %v144
    %v151 = vshrl.u32 2131351028, %v145
    %v152 = vor.u32 %v150, %v151
    %v153 = vshll.u32 2131351028, %v144
    %v154 = vshrl.u32 2102212464, %v145
    %v155 = vor.u32 %v153, %v154
    %v156 = vshll.u32 2102212464, %v144
    %v157 = vshrl.u32 920167782, %v145
    %v158 = vor.u32 %v156, %v157
    %v159 = vshll.u32 920167782, %v144
    %v160 = vshrl.u32 1326507024, %v145
    %v161 = vor.u32 %v159, %v160
    %vm162 = vcmp.lt.s32.totalorder %v143, 1
    %vm163 = vcmp.lt.s32.totalorder %v143, 2
    %vm164 = vcmp.lt.s32.totalorder %v143, 3
    %vm165 = vcmp.lt.s32.totalorder %v143, 4
    %v166 = vsel %vm162, %v146, %v149
    %v167 = vsel %vm165, %v155, 2102212464
    %v168 = vsel %vm164, %v152, %v167
    %v169 = vsel %vm163, %v166, %v168
    %v170 = vsel %vm162, %v149, %v152
    %v171 = vsel %vm165, %v158, 920167782
    %v172 = vsel %vm164, %v155, %v171
    %v173 = vsel %vm163, %v170, %v172
    %v174 = vsel %vm162, %v152, %v155
    %v175 = vsel %vm165, %v161, 1326507024
    %v176 = vsel %vm164, %v158, %v175
    %v177 = vsel %vm163, %v174, %v176
    %v178 = vshll.u32 %v138, 8
    %v179 = vmul.u32.u64.compose %v178, %v177
    %v180 = vextract.low.u32 %v179
    %v181 = vextract.high.u32 %v179
    %v182 = vmul.u32.u64.compose %v178, %v173
    %v183 = vextract.low.u32 %v182
    %v184 = vextract.high.u32 %v182
    %v185 = vmul.u32 %v178, %v169
    %v186 = vadd.s32 %v181, %v183
    %vm187 = vc.u32 %v181, %v183
    %v188 = vadd.s32 %v184, 1
    %v189 = vsel %vm187, %v188, %v184
    %v190 = vadd.s32 %v185, %v189
    %v191 = vadd.s32 %v190, 536870912
    %v192 = vshrl.u32 %v191, 30
    %v193 = vshll.u32 %v192, 30
    %v194 = vsub.s32 %v190, %v193
    %vm195 = vcmp.lt.s32.totalorder %v194, 0
    %v196 = vsub.s32 0, %v194
    %v197 = vsel %vm195, %v196, %v194
    %v198 = vclz %v197
    %v199 = vsub.s32 %v198, 2
    %vm200 = vcmp.gt.s32.totalorder 0, %v199
    %v201 = vsel %vm200, 0, %v199
    %v202 = vsub.s32 32, %v201
    %v203 = vshll.u32 %v194, %v201
    %v204 = vshrl.u32 %v186, %v202
    %v205 = vor.u32 %v203, %v204
    %v206 = vsub.s32 4294967266, %v201
    %v207 = vadd.s32 %v206, 127
    %v208 = vshll.u32 %v207, 23
    %v209 = vor.u32 4788187, %v208
    %v210 = vand.u32 2147483647, %v209
    %v212 = vcvt.s32.f32 %v205
    %v213 = vmul.f32 %v212, %v210
    %v214 = vxor.u32 %v213, 2147483648
    %v215 = vsel %vm132, %v214, %v213
    %v216 = vsub.s32 4, %v192
    %v217 = vsel %vm132, %v216, %v192
    %v218 = vsel %vm131, %v129, %v215
    %v219 = vsel %vm131, 0, %v217
    %v220 = vcosq.f32.pop %v218
    %v221 = vsinq.f32.pop %v218
    %vm222 = vweird.f32 %v129
    %v223 = vadd.s32 %v219, 3
    %v224 = vand.u32 %v223, 3
    %vm225 = vcmp.lt.s32.totalorder %v224, 2
    %vm226 = vcmp.eq.s32.totalorder %v224, 0
    %v227 = vxor.u32 %v221, 2147483648
    %v228 = vsel %vm226, %v220, %v227
    %vm229 = vcmp.eq.s32.totalorder %v224, 2
    %v230 = vxor.u32 %v220, 2147483648
    %v231 = vsel %vm229, %v230, %v221
    %v232 = vsel %vm225, %v228, %v231
    %v233 = vsel %vm222, nan, %v232
    %234 = vst [vmem:[#allocation5 + $0x6] sm:$0x7] %v233
    %v235 = vmul.f32 %v21, 6.2831855
    %v236 = vand.u32 2147483647, %v235
    %vm237 = vcmp.le.f32.partialorder %v236, 0.7853982
    %vm238 = vcmp.lt.s32.totalorder %v235, 0
    %v239 = vand.u32 %v235, 2139095040
    %v240 = vshrl.u32 %v239, 23
    %v241 = vsub.s32 %v240, 127
    %v242 = vand.u32 2147483647, %v235
    %v243 = vand.u32 %v242, 8388607
    %v244 = vor.u32 %v243, 8388608
    %v245 = vsub.s32 0, %v244
    %v246 = vadd.s32 %v241, 1
    %vm247 = vcmp.gt.s32.totalorder %v246, 0
    %v248 = vsel %vm247, %v246, 0
    %v249 = vshrl.u32 %v248, 5
    %v250 = vand.u32 %v248, 31
    %v251 = vsub.s32 32, %v250
    %v252 = vshrl.u32 683565275, %v251
    %v253 = vshll.u32 683565275, %v250
    %v254 = vshrl.u32 2475754826, %v251
    %v255 = vor.u32 %v253, %v254
    %v256 = vshll.u32 2475754826, %v250
    %v257 = vshrl.u32 2131351028, %v251
    %v258 = vor.u32 %v256, %v257
    %v259 = vshll.u32 2131351028, %v250
    %v260 = vshrl.u32 2102212464, %v251
    %v261 = vor.u32 %v259, %v260
    %v262 = vshll.u32 2102212464, %v250
    %v263 = vshrl.u32 920167782, %v251
    %v264 = vor.u32 %v262, %v263
    %v265 = vshll.u32 920167782, %v250
    %v266 = vshrl.u32 1326507024, %v251
    %v267 = vor.u32 %v265, %v266
    %vm268 = vcmp.lt.s32.totalorder %v249, 1
    %vm269 = vcmp.lt.s32.totalorder %v249, 2
    %vm270 = vcmp.lt.s32.totalorder %v249, 3
    %vm271 = vcmp.lt.s32.totalorder %v249, 4
    %v272 = vsel %vm268, %v252, %v255
    %v273 = vsel %vm271, %v261, 2102212464
    %v274 = vsel %vm270, %v258, %v273
    %v275 = vsel %vm269, %v272, %v274
    %v276 = vsel %vm268, %v255, %v258
    %v277 = vsel %vm271, %v264, 920167782
    %v278 = vsel %vm270, %v261, %v277
    %v279 = vsel %vm269, %v276, %v278
    %v280 = vsel %vm268, %v258, %v261
    %v281 = vsel %vm271, %v267, 1326507024
    %v282 = vsel %vm270, %v264, %v281
    %v283 = vsel %vm269, %v280, %v282
    %v284 = vshll.u32 %v244, 8
    %v285 = vmul.u32.u64.compose %v284, %v283
    %v286 = vextract.low.u32 %v285
    %v287 = vextract.high.u32 %v285
    %v288 = vmul.u32.u64.compose %v284, %v279
    %v289 = vextract.low.u32 %v288
    %v290 = vextract.high.u32 %v288
    %v291 = vmul.u32 %v284, %v275
    %v292 = vadd.s32 %v287, %v289
    %vm293 = vc.u32 %v287, %v289
    %v294 = vadd.s32 %v290, 1
    %v295 = vsel %vm293, %v294, %v290
    %v296 = vadd.s32 %v291, %v295
    %v297 = vadd.s32 %v296, 536870912
    %v298 = vshrl.u32 %v297, 30
    %v299 = vshll.u32 %v298, 30
    %v300 = vsub.s32 %v296, %v299
    %vm301 = vcmp.lt.s32.totalorder %v300, 0
    %v302 = vsub.s32 0, %v300
    %v303 = vsel %vm301, %v302, %v300
    %v304 = vclz %v303
    %v305 = vsub.s32 %v304, 2
    %vm306 = vcmp.gt.s32.totalorder 0, %v305
    %v307 = vsel %vm306, 0, %v305
    %v308 = vsub.s32 32, %v307
    %v309 = vshll.u32 %v300, %v307
    %v310 = vshrl.u32 %v292, %v308
    %v311 = vor.u32 %v309, %v310
    %v312 = vsub.s32 4294967266, %v307
    %v313 = vadd.s32 %v312, 127
    %v314 = vshll.u32 %v313, 23
    %v315 = vor.u32 4788187, %v314
    %v316 = vand.u32 2147483647, %v315
    %v318 = vcvt.s32.f32 %v311
    %v319 = vmul.f32 %v318, %v316
    %v320 = vxor.u32 %v319, 2147483648
    %v321 = vsel %vm238, %v320, %v319
    %v322 = vsub.s32 4, %v298
    %v323 = vsel %vm238, %v322, %v298
    %v324 = vsel %vm237, %v235, %v321
    %v325 = vsel %vm237, 0, %v323
    %v326 = vcosq.f32.pop %v324
    %v327 = vsinq.f32.pop %v324
    %vm328 = vweird.f32 %v235
    %v329 = vadd.s32 %v325, 3
    %v330 = vand.u32 %v329, 3
    %vm331 = vcmp.lt.s32.totalorder %v330, 2
    %vm332 = vcmp.eq.s32.totalorder %v330, 0
    %v333 = vxor.u32 %v327, 2147483648
    %v334 = vsel %vm332, %v326, %v333
    %vm335 = vcmp.eq.s32.totalorder %v330, 2
    %v336 = vxor.u32 %v326, 2147483648
    %v337 = vsel %vm335, %v336, %v327
    %v338 = vsel %vm331, %v334, %v337
    %v339 = vsel %vm328, nan, %v338
    %340 = vst [vmem:[#allocation5 + $0x9] sm:$0x7] %v339
    %v341 = vadd.f32 %v235, 1.5707964
    %v342 = vand.u32 2147483647, %v341
    %vm343 = vcmp.le.f32.partialorder %v342, 0.7853982
    %vm344 = vcmp.lt.s32.totalorder %v341, 0
    %v345 = vand.u32 %v341, 2139095040
    %v346 = vshrl.u32 %v345, 23
    %v347 = vsub.s32 %v346, 127
    %v348 = vand.u32 2147483647, %v341
    %v349 = vand.u32 %v348, 8388607
    %v350 = vor.u32 %v349, 8388608
    %v351 = vsub.s32 0, %v350
    %v352 = vadd.s32 %v347, 1
    %vm353 = vcmp.gt.s32.totalorder %v352, 0
    %v354 = vsel %vm353, %v352, 0
    %v355 = vshrl.u32 %v354, 5
    %v356 = vand.u32 %v354, 31
    %v357 = vsub.s32 32, %v356
    %v358 = vshrl.u32 683565275, %v357
    %v359 = vshll.u32 683565275, %v356
    %v360 = vshrl.u32 2475754826, %v357
    %v361 = vor.u32 %v359, %v360
    %v362 = vshll.u32 2475754826, %v356
    %v363 = vshrl.u32 2131351028, %v357
    %v364 = vor.u32 %v362, %v363
    %v365 = vshll.u32 2131351028, %v356
    %v366 = vshrl.u32 2102212464, %v357
    %v367 = vor.u32 %v365, %v366
    %v368 = vshll.u32 2102212464, %v356
    %v369 = vshrl.u32 920167782, %v357
    %v370 = vor.u32 %v368, %v369
    %v371 = vshll.u32 920167782, %v356
    %v372 = vshrl.u32 1326507024, %v357
    %v373 = vor.u32 %v371, %v372
    %vm374 = vcmp.lt.s32.totalorder %v355, 1
    %vm375 = vcmp.lt.s32.totalorder %v355, 2
    %vm376 = vcmp.lt.s32.totalorder %v355, 3
    %vm377 = vcmp.lt.s32.totalorder %v355, 4
    %v378 = vsel %vm374, %v358, %v361
    %v379 = vsel %vm377, %v367, 2102212464
    %v380 = vsel %vm376, %v364, %v379
    %v381 = vsel %vm375, %v378, %v380
    %v382 = vsel %vm374, %v361, %v364
    %v383 = vsel %vm377, %v370, 920167782
    %v384 = vsel %vm376, %v367, %v383
    %v385 = vsel %vm375, %v382, %v384
    %v386 = vsel %vm374, %v364, %v367
    %v387 = vsel %vm377, %v373, 1326507024
    %v388 = vsel %vm376, %v370, %v387
    %v389 = vsel %vm375, %v386, %v388
    %v390 = vshll.u32 %v350, 8
    %v391 = vmul.u32.u64.compose %v390, %v389
    %v392 = vextract.low.u32 %v391
    %v393 = vextract.high.u32 %v391
    %v394 = vmul.u32.u64.compose %v390, %v385
    %v395 = vextract.low.u32 %v394
    %v396 = vextract.high.u32 %v394
    %v397 = vmul.u32 %v390, %v381
    %v398 = vadd.s32 %v393, %v395
    %vm399 = vc.u32 %v393, %v395
    %v400 = vadd.s32 %v396, 1
    %v401 = vsel %vm399, %v400, %v396
    %v402 = vadd.s32 %v397, %v401
    %v403 = vadd.s32 %v402, 536870912
    %v404 = vshrl.u32 %v403, 30
    %v405 = vshll.u32 %v404, 30
    %v406 = vsub.s32 %v402, %v405
    %vm407 = vcmp.lt.s32.totalorder %v406, 0
    %v408 = vsub.s32 0, %v406
    %v409 = vsel %vm407, %v408, %v406
    %v410 = vclz %v409
    %v411 = vsub.s32 %v410, 2
    %vm412 = vcmp.gt.s32.totalorder 0, %v411
    %v413 = vsel %vm412, 0, %v411
    %v414 = vsub.s32 32, %v413
    %v415 = vshll.u32 %v406, %v413
    %v416 = vshrl.u32 %v398, %v414
    %v417 = vor.u32 %v415, %v416
    %v418 = vsub.s32 4294967266, %v413
    %v419 = vadd.s32 %v418, 127
    %v420 = vshll.u32 %v419, 23
    %v421 = vor.u32 4788187, %v420
    %v422 = vand.u32 2147483647, %v421
    %v424 = vcvt.s32.f32 %v417
    %v425 = vmul.f32 %v424, %v422
    %v426 = vxor.u32 %v425, 2147483648
    %v427 = vsel %vm344, %v426, %v425
    %v428 = vsub.s32 4, %v404
    %v429 = vsel %vm344, %v428, %v404
    %v430 = vsel %vm343, %v341, %v427
    %v431 = vsel %vm343, 0, %v429
    %v432 = vcosq.f32.pop %v430
    %v433 = vsinq.f32.pop %v430
    %vm434 = vweird.f32 %v341
    %v435 = vadd.s32 %v431, 3
    %v436 = vand.u32 %v435, 3
    %vm437 = vcmp.lt.s32.totalorder %v436, 2
    %vm438 = vcmp.eq.s32.totalorder %v436, 0
    %v439 = vxor.u32 %v433, 2147483648
    %v440 = vsel %vm438, %v432, %v439
    %vm441 = vcmp.eq.s32.totalorder %v436, 2
    %v442 = vxor.u32 %v432, 2147483648
    %v443 = vsel %vm441, %v442, %v433
    %v444 = vsel %vm437, %v440, %v443
    %v445 = vsel %vm434, nan, %v444
    %446 = vst [vmem:[#allocation5 + $0xc] sm:$0x7] %v445
    %v447 = vmul.f32 %v21, 12.566371
    %v448 = vand.u32 2147483647, %v447
    %vm449 = vcmp.le.f32.partialorder %v448, 0.7853982
    %vm450 = vcmp.lt.s32.totalorder %v447, 0
    %v451 = vand.u32 %v447, 2139095040
    %v452 = vshrl.u32 %v451, 23
    %v453 = vsub.s32 %v452, 127
    %v454 = vand.u32 2147483647, %v447
    %v455 = vand.u32 %v454, 8388607
    %v456 = vor.u32 %v455, 8388608
    %v457 = vsub.s32 0, %v456
    %v458 = vadd.s32 %v453, 1
    %vm459 = vcmp.gt.s32.totalorder %v458, 0
    %v460 = vsel %vm459, %v458, 0
    %v461 = vshrl.u32 %v460, 5
    %v462 = vand.u32 %v460, 31
    %v463 = vsub.s32 32, %v462
    %v464 = vshrl.u32 683565275, %v463
    %v465 = vshll.u32 683565275, %v462
    %v466 = vshrl.u32 2475754826, %v463
    %v467 = vor.u32 %v465, %v466
    %v468 = vshll.u32 2475754826, %v462
    %v469 = vshrl.u32 2131351028, %v463
    %v470 = vor.u32 %v468, %v469
    %v471 = vshll.u32 2131351028, %v462
    %v472 = vshrl.u32 2102212464, %v463
    %v473 = vor.u32 %v471, %v472
    %v474 = vshll.u32 2102212464, %v462
    %v475 = vshrl.u32 920167782, %v463
    %v476 = vor.u32 %v474, %v475
    %v477 = vshll.u32 920167782, %v462
    %v478 = vshrl.u32 1326507024, %v463
    %v479 = vor.u32 %v477, %v478
    %vm480 = vcmp.lt.s32.totalorder %v461, 1
    %vm481 = vcmp.lt.s32.totalorder %v461, 2
    %vm482 = vcmp.lt.s32.totalorder %v461, 3
    %vm483 = vcmp.lt.s32.totalorder %v461, 4
    %v484 = vsel %vm480, %v464, %v467
    %v485 = vsel %vm483, %v473, 2102212464
    %v486 = vsel %vm482, %v470, %v485
    %v487 = vsel %vm481, %v484, %v486
    %v488 = vsel %vm480, %v467, %v470
    %v489 = vsel %vm483, %v476, 920167782
    %v490 = vsel %vm482, %v473, %v489
    %v491 = vsel %vm481, %v488, %v490
    %v492 = vsel %vm480, %v470, %v473
    %v493 = vsel %vm483, %v479, 1326507024
    %v494 = vsel %vm482, %v476, %v493
    %v495 = vsel %vm481, %v492, %v494
    %v496 = vshll.u32 %v456, 8
    %v497 = vmul.u32.u64.compose %v496, %v495
    %v498 = vextract.low.u32 %v497
    %v499 = vextract.high.u32 %v497
    %v500 = vmul.u32.u64.compose %v496, %v491
    %v501 = vextract.low.u32 %v500
    %v502 = vextract.high.u32 %v500
    %v503 = vmul.u32 %v496, %v487
    %v504 = vadd.s32 %v499, %v501
    %vm505 = vc.u32 %v499, %v501
    %v506 = vadd.s32 %v502, 1
    %v507 = vsel %vm505, %v506, %v502
    %v508 = vadd.s32 %v503, %v507
    %v509 = vadd.s32 %v508, 536870912
    %v510 = vshrl.u32 %v509, 30
    %v511 = vshll.u32 %v510, 30
    %v512 = vsub.s32 %v508, %v511
    %vm513 = vcmp.lt.s32.totalorder %v512, 0
    %v514 = vsub.s32 0, %v512
    %v515 = vsel %vm513, %v514, %v512
    %v516 = vclz %v515
    %v517 = vsub.s32 %v516, 2
    %vm518 = vcmp.gt.s32.totalorder 0, %v517
    %v519 = vsel %vm518, 0, %v517
    %v520 = vsub.s32 32, %v519
    %v521 = vshll.u32 %v512, %v519
    %v522 = vshrl.u32 %v504, %v520
    %v523 = vor.u32 %v521, %v522
    %v524 = vsub.s32 4294967266, %v519
    %v525 = vadd.s32 %v524, 127
    %v526 = vshll.u32 %v525, 23
    %v527 = vor.u32 4788187, %v526
    %v528 = vand.u32 2147483647, %v527
    %v530 = vcvt.s32.f32 %v523
    %v531 = vmul.f32 %v530, %v528
    %v532 = vxor.u32 %v531, 2147483648
    %v533 = vsel %vm450, %v532, %v531
    %v534 = vsub.s32 4, %v510
    %v535 = vsel %vm450, %v534, %v510
    %v536 = vsel %vm449, %v447, %v533
    %v537 = vsel %vm449, 0, %v535
    %v538 = vcosq.f32.pop %v536
    %v539 = vsinq.f32.pop %v536
    %vm540 = vweird.f32 %v447
    %v541 = vadd.s32 %v537, 3
    %v542 = vand.u32 %v541, 3
    %vm543 = vcmp.lt.s32.totalorder %v542, 2
    %vm544 = vcmp.eq.s32.totalorder %v542, 0
    %v545 = vxor.u32 %v539, 2147483648
    %v546 = vsel %vm544, %v538, %v545
    %vm547 = vcmp.eq.s32.totalorder %v542, 2
    %v548 = vxor.u32 %v538, 2147483648
    %v549 = vsel %vm547, %v548, %v539
    %v550 = vsel %vm543, %v546, %v549
    %v551 = vsel %vm540, nan, %v550
    %552 = vst [vmem:[#allocation5 + $0xf] sm:$0x7] %v551
    %v553 = vadd.f32 %v447, 1.5707964
    %v554 = vand.u32 2147483647, %v553
    %vm555 = vcmp.le.f32.partialorder %v554, 0.7853982
    %vm556 = vcmp.lt.s32.totalorder %v553, 0
    %v557 = vand.u32 %v553, 2139095040
    %v558 = vshrl.u32 %v557, 23
    %v559 = vsub.s32 %v558, 127
    %v560 = vand.u32 2147483647, %v553
    %v561 = vand.u32 %v560, 8388607
    %v562 = vor.u32 %v561, 8388608
    %v563 = vsub.s32 0, %v562
    %v564 = vadd.s32 %v559, 1
    %vm565 = vcmp.gt.s32.totalorder %v564, 0
    %v566 = vsel %vm565, %v564, 0
    %v567 = vshrl.u32 %v566, 5
    %v568 = vand.u32 %v566, 31
    %v569 = vsub.s32 32, %v568
    %v570 = vshrl.u32 683565275, %v569
    %v571 = vshll.u32 683565275, %v568
    %v572 = vshrl.u32 2475754826, %v569
    %v573 = vor.u32 %v571, %v572
    %v574 = vshll.u32 2475754826, %v568
    %v575 = vshrl.u32 2131351028, %v569
    %v576 = vor.u32 %v574, %v575
    %v577 = vshll.u32 2131351028, %v568
    %v578 = vshrl.u32 2102212464, %v569
    %v579 = vor.u32 %v577, %v578
    %v580 = vshll.u32 2102212464, %v568
    %v581 = vshrl.u32 920167782, %v569
    %v582 = vor.u32 %v580, %v581
    %v583 = vshll.u32 920167782, %v568
    %v584 = vshrl.u32 1326507024, %v569
    %v585 = vor.u32 %v583, %v584
    %vm586 = vcmp.lt.s32.totalorder %v567, 1
    %vm587 = vcmp.lt.s32.totalorder %v567, 2
    %vm588 = vcmp.lt.s32.totalorder %v567, 3
    %vm589 = vcmp.lt.s32.totalorder %v567, 4
    %v590 = vsel %vm586, %v570, %v573
    %v591 = vsel %vm589, %v579, 2102212464
    %v592 = vsel %vm588, %v576, %v591
    %v593 = vsel %vm587, %v590, %v592
    %v594 = vsel %vm586, %v573, %v576
    %v595 = vsel %vm589, %v582, 920167782
    %v596 = vsel %vm588, %v579, %v595
    %v597 = vsel %vm587, %v594, %v596
    %v598 = vsel %vm586, %v576, %v579
    %v599 = vsel %vm589, %v585, 1326507024
    %v600 = vsel %vm588, %v582, %v599
    %v601 = vsel %vm587, %v598, %v600
    %v602 = vshll.u32 %v562, 8
    %v603 = vmul.u32.u64.compose %v602, %v601
    %v604 = vextract.low.u32 %v603
    %v605 = vextract.high.u32 %v603
    %v606 = vmul.u32.u64.compose %v602, %v597
    %v607 = vextract.low.u32 %v606
    %v608 = vextract.high.u32 %v606
    %v609 = vmul.u32 %v602, %v593
    %v610 = vadd.s32 %v605, %v607
    %vm611 = vc.u32 %v605, %v607
    %v612 = vadd.s32 %v608, 1
    %v613 = vsel %vm611, %v612, %v608
    %v614 = vadd.s32 %v609, %v613
    %v615 = vadd.s32 %v614, 536870912
    %v616 = vshrl.u32 %v615, 30
    %v617 = vshll.u32 %v616, 30
    %v618 = vsub.s32 %v614, %v617
    %vm619 = vcmp.lt.s32.totalorder %v618, 0
    %v620 = vsub.s32 0, %v618
    %v621 = vsel %vm619, %v620, %v618
    %v622 = vclz %v621
    %v623 = vsub.s32 %v622, 2
    %vm624 = vcmp.gt.s32.totalorder 0, %v623
    %v625 = vsel %vm624, 0, %v623
    %v626 = vsub.s32 32, %v625
    %v627 = vshll.u32 %v618, %v625
    %v628 = vshrl.u32 %v610, %v626
    %v629 = vor.u32 %v627, %v628
    %v630 = vsub.s32 4294967266, %v625
    %v631 = vadd.s32 %v630, 127
    %v632 = vshll.u32 %v631, 23
    %v633 = vor.u32 4788187, %v632
    %v634 = vand.u32 2147483647, %v633
    %v636 = vcvt.s32.f32 %v629
    %v637 = vmul.f32 %v636, %v634
    %v638 = vxor.u32 %v637, 2147483648
    %v639 = vsel %vm556, %v638, %v637
    %v640 = vsub.s32 4, %v616
    %v641 = vsel %vm556, %v640, %v616
    %v642 = vsel %vm555, %v553, %v639
    %v643 = vsel %vm555, 0, %v641
    %v644 = vcosq.f32.pop %v642
    %v645 = vsinq.f32.pop %v642
    %vm646 = vweird.f32 %v553
    %v647 = vadd.s32 %v643, 3
    %v648 = vand.u32 %v647, 3
    %vm649 = vcmp.lt.s32.totalorder %v648, 2
    %vm650 = vcmp.eq.s32.totalorder %v648, 0
    %v651 = vxor.u32 %v645, 2147483648
    %v652 = vsel %vm650, %v644, %v651
    %vm653 = vcmp.eq.s32.totalorder %v648, 2
    %v654 = vxor.u32 %v644, 2147483648
    %v655 = vsel %vm653, %v654, %v645
    %v656 = vsel %vm649, %v652, %v655
    %v657 = vsel %vm646, nan, %v656
    %658 = vst [vmem:[#allocation5 + $0x12] sm:$0x7] %v657
    %v659 = vmul.f32 %v21, 25.132742
    %v660 = vand.u32 2147483647, %v659
    %vm661 = vcmp.le.f32.partialorder %v660, 0.7853982
    %vm662 = vcmp.lt.s32.totalorder %v659, 0
    %v663 = vand.u32 %v659, 2139095040
    %v664 = vshrl.u32 %v663, 23
    %v665 = vsub.s32 %v664, 127
    %v666 = vand.u32 2147483647, %v659
    %v667 = vand.u32 %v666, 8388607
    %v668 = vor.u32 %v667, 8388608
    %v669 = vsub.s32 0, %v668
    %v670 = vadd.s32 %v665, 1
    %vm671 = vcmp.gt.s32.totalorder %v670, 0
    %v672 = vsel %vm671, %v670, 0
    %v673 = vshrl.u32 %v672, 5
    %v674 = vand.u32 %v672, 31
    %v675 = vsub.s32 32, %v674
    %v676 = vshrl.u32 683565275, %v675
    %v677 = vshll.u32 683565275, %v674
    %v678 = vshrl.u32 2475754826, %v675
    %v679 = vor.u32 %v677, %v678
    %v680 = vshll.u32 2475754826, %v674
    %v681 = vshrl.u32 2131351028, %v675
    %v682 = vor.u32 %v680, %v681
    %v683 = vshll.u32 2131351028, %v674
    %v684 = vshrl.u32 2102212464, %v675
    %v685 = vor.u32 %v683, %v684
    %v686 = vshll.u32 2102212464, %v674
    %v687 = vshrl.u32 920167782, %v675
    %v688 = vor.u32 %v686, %v687
    %v689 = vshll.u32 920167782, %v674
    %v690 = vshrl.u32 1326507024, %v675
    %v691 = vor.u32 %v689, %v690
    %vm692 = vcmp.lt.s32.totalorder %v673, 1
    %vm693 = vcmp.lt.s32.totalorder %v673, 2
    %vm694 = vcmp.lt.s32.totalorder %v673, 3
    %vm695 = vcmp.lt.s32.totalorder %v673, 4
    %v696 = vsel %vm692, %v676, %v679
    %v697 = vsel %vm695, %v685, 2102212464
    %v698 = vsel %vm694, %v682, %v697
    %v699 = vsel %vm693, %v696, %v698
    %v700 = vsel %vm692, %v679, %v682
    %v701 = vsel %vm695, %v688, 920167782
    %v702 = vsel %vm694, %v685, %v701
    %v703 = vsel %vm693, %v700, %v702
    %v704 = vsel %vm692, %v682, %v685
    %v705 = vsel %vm695, %v691, 1326507024
    %v706 = vsel %vm694, %v688, %v705
    %v707 = vsel %vm693, %v704, %v706
    %v708 = vshll.u32 %v668, 8
    %v709 = vmul.u32.u64.compose %v708, %v707
    %v710 = vextract.low.u32 %v709
    %v711 = vextract.high.u32 %v709
    %v712 = vmul.u32.u64.compose %v708, %v703
    %v713 = vextract.low.u32 %v712
    %v714 = vextract.high.u32 %v712
    %v715 = vmul.u32 %v708, %v699
    %v716 = vadd.s32 %v711, %v713
    %vm717 = vc.u32 %v711, %v713
    %v718 = vadd.s32 %v714, 1
    %v719 = vsel %vm717, %v718, %v714
    %v720 = vadd.s32 %v715, %v719
    %v721 = vadd.s32 %v720, 536870912
    %v722 = vshrl.u32 %v721, 30
    %v723 = vshll.u32 %v722, 30
    %v724 = vsub.s32 %v720, %v723
    %vm725 = vcmp.lt.s32.totalorder %v724, 0
    %v726 = vsub.s32 0, %v724
    %v727 = vsel %vm725, %v726, %v724
    %v728 = vclz %v727
    %v729 = vsub.s32 %v728, 2
    %vm730 = vcmp.gt.s32.totalorder 0, %v729
    %v731 = vsel %vm730, 0, %v729
    %v732 = vsub.s32 32, %v731
    %v733 = vshll.u32 %v724, %v731
    %v734 = vshrl.u32 %v716, %v732
    %v735 = vor.u32 %v733, %v734
    %v736 = vsub.s32 4294967266, %v731
    %v737 = vadd.s32 %v736, 127
    %v738 = vshll.u32 %v737, 23
    %v739 = vor.u32 4788187, %v738
    %v740 = vand.u32 2147483647, %v739
    %v742 = vcvt.s32.f32 %v735
    %v743 = vmul.f32 %v742, %v740
    %v744 = vxor.u32 %v743, 2147483648
    %v745 = vsel %vm662, %v744, %v743
    %v746 = vsub.s32 4, %v722
    %v747 = vsel %vm662, %v746, %v722
    %v748 = vsel %vm661, %v659, %v745
    %v749 = vsel %vm661, 0, %v747
    %v750 = vcosq.f32.pop %v748
    %v751 = vsinq.f32.pop %v748
    %vm752 = vweird.f32 %v659
    %v753 = vadd.s32 %v749, 3
    %v754 = vand.u32 %v753, 3
    %vm755 = vcmp.lt.s32.totalorder %v754, 2
    %vm756 = vcmp.eq.s32.totalorder %v754, 0
    %v757 = vxor.u32 %v751, 2147483648
    %v758 = vsel %vm756, %v750, %v757
    %vm759 = vcmp.eq.s32.totalorder %v754, 2
    %v760 = vxor.u32 %v750, 2147483648
    %v761 = vsel %vm759, %v760, %v751
    %v762 = vsel %vm755, %v758, %v761
    %v763 = vsel %vm752, nan, %v762
    %764 = vst [vmem:[#allocation5 + $0x15] sm:$0x7] %v763
    %v765 = vadd.f32 %v659, 1.5707964
    %v766 = vand.u32 2147483647, %v765
    %vm767 = vcmp.le.f32.partialorder %v766, 0.7853982
    %vm768 = vcmp.lt.s32.totalorder %v765, 0
    %v769 = vand.u32 %v765, 2139095040
    %v770 = vshrl.u32 %v769, 23
    %v771 = vsub.s32 %v770, 127
    %v772 = vand.u32 2147483647, %v765
    %v773 = vand.u32 %v772, 8388607
    %v774 = vor.u32 %v773, 8388608
    %v775 = vsub.s32 0, %v774
    %v776 = vadd.s32 %v771, 1
    %vm777 = vcmp.gt.s32.totalorder %v776, 0
    %v778 = vsel %vm777, %v776, 0
    %v779 = vshrl.u32 %v778, 5
    %v780 = vand.u32 %v778, 31
    %v781 = vsub.s32 32, %v780
    %v782 = vshrl.u32 683565275, %v781
    %v783 = vshll.u32 683565275, %v780
    %v784 = vshrl.u32 2475754826, %v781
    %v785 = vor.u32 %v783, %v784
    %v786 = vshll.u32 2475754826, %v780
    %v787 = vshrl.u32 2131351028, %v781
    %v788 = vor.u32 %v786, %v787
    %v789 = vshll.u32 2131351028, %v780
    %v790 = vshrl.u32 2102212464, %v781
    %v791 = vor.u32 %v789, %v790
    %v792 = vshll.u32 2102212464, %v780
    %v793 = vshrl.u32 920167782, %v781
    %v794 = vor.u32 %v792, %v793
    %v795 = vshll.u32 920167782, %v780
    %v796 = vshrl.u32 1326507024, %v781
    %v797 = vor.u32 %v795, %v796
    %vm798 = vcmp.lt.s32.totalorder %v779, 1
    %vm799 = vcmp.lt.s32.totalorder %v779, 2
    %vm800 = vcmp.lt.s32.totalorder %v779, 3
    %vm801 = vcmp.lt.s32.totalorder %v779, 4
    %v802 = vsel %vm798, %v782, %v785
    %v803 = vsel %vm801, %v791, 2102212464
    %v804 = vsel %vm800, %v788, %v803
    %v805 = vsel %vm799, %v802, %v804
    %v806 = vsel %vm798, %v785, %v788
    %v807 = vsel %vm801, %v794, 920167782
    %v808 = vsel %vm800, %v791, %v807
    %v809 = vsel %vm799, %v806, %v808
    %v810 = vsel %vm798, %v788, %v791
    %v811 = vsel %vm801, %v797, 1326507024
    %v812 = vsel %vm800, %v794, %v811
    %v813 = vsel %vm799, %v810, %v812
    %v814 = vshll.u32 %v774, 8
    %v815 = vmul.u32.u64.compose %v814, %v813
    %v816 = vextract.low.u32 %v815
    %v817 = vextract.high.u32 %v815
    %v818 = vmul.u32.u64.compose %v814, %v809
    %v819 = vextract.low.u32 %v818
    %v820 = vextract.high.u32 %v818
    %v821 = vmul.u32 %v814, %v805
    %v822 = vadd.s32 %v817, %v819
    %vm823 = vc.u32 %v817, %v819
    %v824 = vadd.s32 %v820, 1
    %v825 = vsel %vm823, %v824, %v820
    %v826 = vadd.s32 %v821, %v825
    %v827 = vadd.s32 %v826, 536870912
    %v828 = vshrl.u32 %v827, 30
    %v829 = vshll.u32 %v828, 30
    %v830 = vsub.s32 %v826, %v829
    %vm831 = vcmp.lt.s32.totalorder %v830, 0
    %v832 = vsub.s32 0, %v830
    %v833 = vsel %vm831, %v832, %v830
    %v834 = vclz %v833
    %v835 = vsub.s32 %v834, 2
    %vm836 = vcmp.gt.s32.totalorder 0, %v835
    %v837 = vsel %vm836, 0, %v835
    %v838 = vsub.s32 32, %v837
    %v839 = vshll.u32 %v830, %v837
    %v840 = vshrl.u32 %v822, %v838
    %v841 = vor.u32 %v839, %v840
    %v842 = vsub.s32 4294967266, %v837
    %v843 = vadd.s32 %v842, 127
    %v844 = vshll.u32 %v843, 23
    %v845 = vor.u32 4788187, %v844
    %v846 = vand.u32 2147483647, %v845
    %v848 = vcvt.s32.f32 %v841
    %v849 = vmul.f32 %v848, %v846
    %v850 = vxor.u32 %v849, 2147483648
    %v851 = vsel %vm768, %v850, %v849
    %v852 = vsub.s32 4, %v828
    %v853 = vsel %vm768, %v852, %v828
    %v854 = vsel %vm767, %v765, %v851
    %v855 = vsel %vm767, 0, %v853
    %v856 = vcosq.f32.pop %v854
    %v857 = vsinq.f32.pop %v854
    %vm858 = vweird.f32 %v765
    %v859 = vadd.s32 %v855, 3
    %v860 = vand.u32 %v859, 3
    %vm861 = vcmp.lt.s32.totalorder %v860, 2
    %vm862 = vcmp.eq.s32.totalorder %v860, 0
    %v863 = vxor.u32 %v857, 2147483648
    %v864 = vsel %vm862, %v856, %v863
    %vm865 = vcmp.eq.s32.totalorder %v860, 2
    %v866 = vxor.u32 %v856, 2147483648
    %v867 = vsel %vm865, %v866, %v857
    %v868 = vsel %vm861, %v864, %v867
    %v869 = vsel %vm858, nan, %v868
    %870 = vst [vmem:[#allocation5 + $0x18] sm:$0x7] %v869
    %v871 = vmul.f32 %v21, 50.265484
    %v872 = vand.u32 2147483647, %v871
    %vm873 = vcmp.le.f32.partialorder %v872, 0.7853982
    %vm874 = vcmp.lt.s32.totalorder %v871, 0
    %v875 = vand.u32 %v871, 2139095040
    %v876 = vshrl.u32 %v875, 23
    %v877 = vsub.s32 %v876, 127
    %v878 = vand.u32 2147483647, %v871
    %v879 = vand.u32 %v878, 8388607
    %v880 = vor.u32 %v879, 8388608
    %v881 = vsub.s32 0, %v880
    %v882 = vadd.s32 %v877, 1
    %vm883 = vcmp.gt.s32.totalorder %v882, 0
    %v884 = vsel %vm883, %v882, 0
    %v885 = vshrl.u32 %v884, 5
    %v886 = vand.u32 %v884, 31
    %v887 = vsub.s32 32, %v886
    %v888 = vshrl.u32 683565275, %v887
    %v889 = vshll.u32 683565275, %v886
    %v890 = vshrl.u32 2475754826, %v887
    %v891 = vor.u32 %v889, %v890
    %v892 = vshll.u32 2475754826, %v886
    %v893 = vshrl.u32 2131351028, %v887
    %v894 = vor.u32 %v892, %v893
    %v895 = vshll.u32 2131351028, %v886
    %v896 = vshrl.u32 2102212464, %v887
    %v897 = vor.u32 %v895, %v896
    %v898 = vshll.u32 2102212464, %v886
    %v899 = vshrl.u32 920167782, %v887
    %v900 = vor.u32 %v898, %v899
    %v901 = vshll.u32 920167782, %v886
    %v902 = vshrl.u32 1326507024, %v887
    %v903 = vor.u32 %v901, %v902
    %vm904 = vcmp.lt.s32.totalorder %v885, 1
    %vm905 = vcmp.lt.s32.totalorder %v885, 2
    %vm906 = vcmp.lt.s32.totalorder %v885, 3
    %vm907 = vcmp.lt.s32.totalorder %v885, 4
    %v908 = vsel %vm904, %v888, %v891
    %v909 = vsel %vm907, %v897, 2102212464
    %v910 = vsel %vm906, %v894, %v909
    %v911 = vsel %vm905, %v908, %v910
    %v912 = vsel %vm904, %v891, %v894
    %v913 = vsel %vm907, %v900, 920167782
    %v914 = vsel %vm906, %v897, %v913
    %v915 = vsel %vm905, %v912, %v914
    %v916 = vsel %vm904, %v894, %v897
    %v917 = vsel %vm907, %v903, 1326507024
    %v918 = vsel %vm906, %v900, %v917
    %v919 = vsel %vm905, %v916, %v918
    %v920 = vshll.u32 %v880, 8
    %v921 = vmul.u32.u64.compose %v920, %v919
    %v922 = vextract.low.u32 %v921
    %v923 = vextract.high.u32 %v921
    %v924 = vmul.u32.u64.compose %v920, %v915
    %v925 = vextract.low.u32 %v924
    %v926 = vextract.high.u32 %v924
    %v927 = vmul.u32 %v920, %v911
    %v928 = vadd.s32 %v923, %v925
    %vm929 = vc.u32 %v923, %v925
    %v930 = vadd.s32 %v926, 1
    %v931 = vsel %vm929, %v930, %v926
    %v932 = vadd.s32 %v927, %v931
    %v933 = vadd.s32 %v932, 536870912
    %v934 = vshrl.u32 %v933, 30
    %v935 = vshll.u32 %v934, 30
    %v936 = vsub.s32 %v932, %v935
    %vm937 = vcmp.lt.s32.totalorder %v936, 0
    %v938 = vsub.s32 0, %v936
    %v939 = vsel %vm937, %v938, %v936
    %v940 = vclz %v939
    %v941 = vsub.s32 %v940, 2
    %vm942 = vcmp.gt.s32.totalorder 0, %v941
    %v943 = vsel %vm942, 0, %v941
    %v944 = vsub.s32 32, %v943
    %v945 = vshll.u32 %v936, %v943
    %v946 = vshrl.u32 %v928, %v944
    %v947 = vor.u32 %v945, %v946
    %v948 = vsub.s32 4294967266, %v943
    %v949 = vadd.s32 %v948, 127
    %v950 = vshll.u32 %v949, 23
    %v951 = vor.u32 4788187, %v950
    %v952 = vand.u32 2147483647, %v951
    %v954 = vcvt.s32.f32 %v947
    %v955 = vmul.f32 %v954, %v952
    %v956 = vxor.u32 %v955, 2147483648
    %v957 = vsel %vm874, %v956, %v955
    %v958 = vsub.s32 4, %v934
    %v959 = vsel %vm874, %v958, %v934
    %v960 = vsel %vm873, %v871, %v957
    %v961 = vsel %vm873, 0, %v959
    %v962 = vcosq.f32.pop %v960
    %v963 = vsinq.f32.pop %v960
    %vm964 = vweird.f32 %v871
    %v965 = vadd.s32 %v961, 3
    %v966 = vand.u32 %v965, 3
    %vm967 = vcmp.lt.s32.totalorder %v966, 2
    %vm968 = vcmp.eq.s32.totalorder %v966, 0
    %v969 = vxor.u32 %v963, 2147483648
    %v970 = vsel %vm968, %v962, %v969
    %vm971 = vcmp.eq.s32.totalorder %v966, 2
    %v972 = vxor.u32 %v962, 2147483648
    %v973 = vsel %vm971, %v972, %v963
    %v974 = vsel %vm967, %v970, %v973
    %v975 = vsel %vm964, nan, %v974
    %976 = vst [vmem:[#allocation5 + $0x1b] sm:$0x7] %v975
    %v977 = vadd.f32 %v871, 1.5707964
    %v978 = vand.u32 2147483647, %v977
    %vm979 = vcmp.le.f32.partialorder %v978, 0.7853982
    %vm980 = vcmp.lt.s32.totalorder %v977, 0
    %v981 = vand.u32 %v977, 2139095040
    %v982 = vshrl.u32 %v981, 23
    %v983 = vsub.s32 %v982, 127
    %v984 = vand.u32 2147483647, %v977
    %v985 = vand.u32 %v984, 8388607
    %v986 = vor.u32 %v985, 8388608
    %v987 = vsub.s32 0, %v986
    %v988 = vadd.s32 %v983, 1
    %vm989 = vcmp.gt.s32.totalorder %v988, 0
    %v990 = vsel %vm989, %v988, 0
    %v991 = vshrl.u32 %v990, 5
    %v992 = vand.u32 %v990, 31
    %v993 = vsub.s32 32, %v992
    %v994 = vshrl.u32 683565275, %v993
    %v995 = vshll.u32 683565275, %v992
    %v996 = vshrl.u32 2475754826, %v993
    %v997 = vor.u32 %v995, %v996
    %v998 = vshll.u32 2475754826, %v992
    %v999 = vshrl.u32 2131351028, %v993
    %v1000 = vor.u32 %v998, %v999
    %v1001 = vshll.u32 2131351028, %v992
    %v1002 = vshrl.u32 2102212464, %v993
    %v1003 = vor.u32 %v1001, %v1002
    %v1004 = vshll.u32 2102212464, %v992
    %v1005 = vshrl.u32 920167782, %v993
    %v1006 = vor.u32 %v1004, %v1005
    %v1007 = vshll.u32 920167782, %v992
    %v1008 = vshrl.u32 1326507024, %v993
    %v1009 = vor.u32 %v1007, %v1008
    %vm1010 = vcmp.lt.s32.totalorder %v991, 1
    %vm1011 = vcmp.lt.s32.totalorder %v991, 2
    %vm1012 = vcmp.lt.s32.totalorder %v991, 3
    %vm1013 = vcmp.lt.s32.totalorder %v991, 4
    %v1014 = vsel %vm1010, %v994, %v997
    %v1015 = vsel %vm1013, %v1003, 2102212464
    %v1016 = vsel %vm1012, %v1000, %v1015
    %v1017 = vsel %vm1011, %v1014, %v1016
    %v1018 = vsel %vm1010, %v997, %v1000
    %v1019 = vsel %vm1013, %v1006, 920167782
    %v1020 = vsel %vm1012, %v1003, %v1019
    %v1021 = vsel %vm1011, %v1018, %v1020
    %v1022 = vsel %vm1010, %v1000, %v1003
    %v1023 = vsel %vm1013, %v1009, 1326507024
    %v1024 = vsel %vm1012, %v1006, %v1023
    %v1025 = vsel %vm1011, %v1022, %v1024
    %v1026 = vshll.u32 %v986, 8
    %v1027 = vmul.u32.u64.compose %v1026, %v1025
    %v1028 = vextract.low.u32 %v1027
    %v1029 = vextract.high.u32 %v1027
    %v1030 = vmul.u32.u64.compose %v1026, %v1021
    %v1031 = vextract.low.u32 %v1030
    %v1032 = vextract.high.u32 %v1030
    %v1033 = vmul.u32 %v1026, %v1017
    %v1034 = vadd.s32 %v1029, %v1031
    %vm1035 = vc.u32 %v1029, %v1031
    %v1036 = vadd.s32 %v1032, 1
    %v1037 = vsel %vm1035, %v1036, %v1032
    %v1038 = vadd.s32 %v1033, %v1037
    %v1039 = vadd.s32 %v1038, 536870912
    %v1040 = vshrl.u32 %v1039, 30
    %v1041 = vshll.u32 %v1040, 30
    %v1042 = vsub.s32 %v1038, %v1041
    %vm1043 = vcmp.lt.s32.totalorder %v1042, 0
    %v1044 = vsub.s32 0, %v1042
    %v1045 = vsel %vm1043, %v1044, %v1042
    %v1046 = vclz %v1045
    %v1047 = vsub.s32 %v1046, 2
    %vm1048 = vcmp.gt.s32.totalorder 0, %v1047
    %v1049 = vsel %vm1048, 0, %v1047
    %v1050 = vsub.s32 32, %v1049
    %v1051 = vshll.u32 %v1042, %v1049
    %v1052 = vshrl.u32 %v1034, %v1050
    %v1053 = vor.u32 %v1051, %v1052
    %v1054 = vsub.s32 4294967266, %v1049
    %v1055 = vadd.s32 %v1054, 127
    %v1056 = vshll.u32 %v1055, 23
    %v1057 = vor.u32 4788187, %v1056
    %v1058 = vand.u32 2147483647, %v1057
    %v1060 = vcvt.s32.f32 %v1053
    %v1061 = vmul.f32 %v1060, %v1058
    %v1062 = vxor.u32 %v1061, 2147483648
    %v1063 = vsel %vm980, %v1062, %v1061
    %v1064 = vsub.s32 4, %v1040
    %v1065 = vsel %vm980, %v1064, %v1040
    %v1066 = vsel %vm979, %v977, %v1063
    %v1067 = vsel %vm979, 0, %v1065
    %v1068 = vcosq.f32.pop %v1066
    %v1069 = vsinq.f32.pop %v1066
    %vm1070 = vweird.f32 %v977
    %v1071 = vadd.s32 %v1067, 3
    %v1072 = vand.u32 %v1071, 3
    %vm1073 = vcmp.lt.s32.totalorder %v1072, 2
    %vm1074 = vcmp.eq.s32.totalorder %v1072, 0
    %v1075 = vxor.u32 %v1069, 2147483648
    %v1076 = vsel %vm1074, %v1068, %v1075
    %vm1077 = vcmp.eq.s32.totalorder %v1072, 2
    %v1078 = vxor.u32 %v1068, 2147483648
    %v1079 = vsel %vm1077, %v1078, %v1069
    %v1080 = vsel %vm1073, %v1076, %v1079
    %v1081 = vsel %vm1070, nan, %v1080
    %1082 = vst [vmem:[#allocation5 + $0x1e] sm:$0x7] %v1081
    %v1083 = vmul.f32 %v21, 100.53097
    %v1084 = vand.u32 2147483647, %v1083
    %vm1085 = vcmp.le.f32.partialorder %v1084, 0.7853982
    %vm1086 = vcmp.lt.s32.totalorder %v1083, 0
    %v1087 = vand.u32 %v1083, 2139095040
    %v1088 = vshrl.u32 %v1087, 23
    %v1089 = vsub.s32 %v1088, 127
    %v1090 = vand.u32 2147483647, %v1083
    %v1091 = vand.u32 %v1090, 8388607
    %v1092 = vor.u32 %v1091, 8388608
    %v1093 = vsub.s32 0, %v1092
    %v1094 = vadd.s32 %v1089, 1
    %vm1095 = vcmp.gt.s32.totalorder %v1094, 0
    %v1096 = vsel %vm1095, %v1094, 0
    %v1097 = vshrl.u32 %v1096, 5
    %v1098 = vand.u32 %v1096, 31
    %v1099 = vsub.s32 32, %v1098
    %v1100 = vshrl.u32 683565275, %v1099
    %v1101 = vshll.u32 683565275, %v1098
    %v1102 = vshrl.u32 2475754826, %v1099
    %v1103 = vor.u32 %v1101, %v1102
    %v1104 = vshll.u32 2475754826, %v1098
    %v1105 = vshrl.u32 2131351028, %v1099
    %v1106 = vor.u32 %v1104, %v1105
    %v1107 = vshll.u32 2131351028, %v1098
    %v1108 = vshrl.u32 2102212464, %v1099
    %v1109 = vor.u32 %v1107, %v1108
    %v1110 = vshll.u32 2102212464, %v1098
    %v1111 = vshrl.u32 920167782, %v1099
    %v1112 = vor.u32 %v1110, %v1111
    %v1113 = vshll.u32 920167782, %v1098
    %v1114 = vshrl.u32 1326507024, %v1099
    %v1115 = vor.u32 %v1113, %v1114
    %vm1116 = vcmp.lt.s32.totalorder %v1097, 1
    %vm1117 = vcmp.lt.s32.totalorder %v1097, 2
    %vm1118 = vcmp.lt.s32.totalorder %v1097, 3
    %vm1119 = vcmp.lt.s32.totalorder %v1097, 4
    %v1120 = vsel %vm1116, %v1100, %v1103
    %v1121 = vsel %vm1119, %v1109, 2102212464
    %v1122 = vsel %vm1118, %v1106, %v1121
    %v1123 = vsel %vm1117, %v1120, %v1122
    %v1124 = vsel %vm1116, %v1103, %v1106
    %v1125 = vsel %vm1119, %v1112, 920167782
    %v1126 = vsel %vm1118, %v1109, %v1125
    %v1127 = vsel %vm1117, %v1124, %v1126
    %v1128 = vsel %vm1116, %v1106, %v1109
    %v1129 = vsel %vm1119, %v1115, 1326507024
    %v1130 = vsel %vm1118, %v1112, %v1129
    %v1131 = vsel %vm1117, %v1128, %v1130
    %v1132 = vshll.u32 %v1092, 8
    %v1133 = vmul.u32.u64.compose %v1132, %v1131
    %v1134 = vextract.low.u32 %v1133
    %v1135 = vextract.high.u32 %v1133
    %v1136 = vmul.u32.u64.compose %v1132, %v1127
    %v1137 = vextract.low.u32 %v1136
    %v1138 = vextract.high.u32 %v1136
    %v1139 = vmul.u32 %v1132, %v1123
    %v1140 = vadd.s32 %v1135, %v1137
    %vm1141 = vc.u32 %v1135, %v1137
    %v1142 = vadd.s32 %v1138, 1
    %v1143 = vsel %vm1141, %v1142, %v1138
    %v1144 = vadd.s32 %v1139, %v1143
    %v1145 = vadd.s32 %v1144, 536870912
    %v1146 = vshrl.u32 %v1145, 30
    %v1147 = vshll.u32 %v1146, 30
    %v1148 = vsub.s32 %v1144, %v1147
    %vm1149 = vcmp.lt.s32.totalorder %v1148, 0
    %v1150 = vsub.s32 0, %v1148
    %v1151 = vsel %vm1149, %v1150, %v1148
    %v1152 = vclz %v1151
    %v1153 = vsub.s32 %v1152, 2
    %vm1154 = vcmp.gt.s32.totalorder 0, %v1153
    %v1155 = vsel %vm1154, 0, %v1153
    %v1156 = vsub.s32 32, %v1155
    %v1157 = vshll.u32 %v1148, %v1155
    %v1158 = vshrl.u32 %v1140, %v1156
    %v1159 = vor.u32 %v1157, %v1158
    %v1160 = vsub.s32 4294967266, %v1155
    %v1161 = vadd.s32 %v1160, 127
    %v1162 = vshll.u32 %v1161, 23
    %v1163 = vor.u32 4788187, %v1162
    %v1164 = vand.u32 2147483647, %v1163
    %v1166 = vcvt.s32.f32 %v1159
    %v1167 = vmul.f32 %v1166, %v1164
    %v1168 = vxor.u32 %v1167, 2147483648
    %v1169 = vsel %vm1086, %v1168, %v1167
    %v1170 = vsub.s32 4, %v1146
    %v1171 = vsel %vm1086, %v1170, %v1146
    %v1172 = vsel %vm1085, %v1083, %v1169
    %v1173 = vsel %vm1085, 0, %v1171
    %v1174 = vcosq.f32.pop %v1172
    %v1175 = vsinq.f32.pop %v1172
    %vm1176 = vweird.f32 %v1083
    %v1177 = vadd.s32 %v1173, 3
    %v1178 = vand.u32 %v1177, 3
    %vm1179 = vcmp.lt.s32.totalorder %v1178, 2
    %vm1180 = vcmp.eq.s32.totalorder %v1178, 0
    %v1181 = vxor.u32 %v1175, 2147483648
    %v1182 = vsel %vm1180, %v1174, %v1181
    %vm1183 = vcmp.eq.s32.totalorder %v1178, 2
    %v1184 = vxor.u32 %v1174, 2147483648
    %v1185 = vsel %vm1183, %v1184, %v1175
    %v1186 = vsel %vm1179, %v1182, %v1185
    %v1187 = vsel %vm1176, nan, %v1186
    %1188 = vst [vmem:[#allocation5 + $0x21] sm:$0x7] %v1187
    %v1189 = vadd.f32 %v1083, 1.5707964
    %v1190 = vand.u32 2147483647, %v1189
    %vm1191 = vcmp.le.f32.partialorder %v1190, 0.7853982
    %vm1192 = vcmp.lt.s32.totalorder %v1189, 0
    %v1193 = vand.u32 %v1189, 2139095040
    %v1194 = vshrl.u32 %v1193, 23
    %v1195 = vsub.s32 %v1194, 127
    %v1196 = vand.u32 2147483647, %v1189
    %v1197 = vand.u32 %v1196, 8388607
    %v1198 = vor.u32 %v1197, 8388608
    %v1199 = vsub.s32 0, %v1198
    %v1200 = vadd.s32 %v1195, 1
    %vm1201 = vcmp.gt.s32.totalorder %v1200, 0
    %v1202 = vsel %vm1201, %v1200, 0
    %v1203 = vshrl.u32 %v1202, 5
    %v1204 = vand.u32 %v1202, 31
    %v1205 = vsub.s32 32, %v1204
    %v1206 = vshrl.u32 683565275, %v1205
    %v1207 = vshll.u32 683565275, %v1204
    %v1208 = vshrl.u32 2475754826, %v1205
    %v1209 = vor.u32 %v1207, %v1208
    %v1210 = vshll.u32 2475754826, %v1204
    %v1211 = vshrl.u32 2131351028, %v1205
    %v1212 = vor.u32 %v1210, %v1211
    %v1213 = vshll.u32 2131351028, %v1204
    %v1214 = vshrl.u32 2102212464, %v1205
    %v1215 = vor.u32 %v1213, %v1214
    %v1216 = vshll.u32 2102212464, %v1204
    %v1217 = vshrl.u32 920167782, %v1205
    %v1218 = vor.u32 %v1216, %v1217
    %v1219 = vshll.u32 920167782, %v1204
    %v1220 = vshrl.u32 1326507024, %v1205
    %v1221 = vor.u32 %v1219, %v1220
    %vm1222 = vcmp.lt.s32.totalorder %v1203, 1
    %vm1223 = vcmp.lt.s32.totalorder %v1203, 2
    %vm1224 = vcmp.lt.s32.totalorder %v1203, 3
    %vm1225 = vcmp.lt.s32.totalorder %v1203, 4
    %v1226 = vsel %vm1222, %v1206, %v1209
    %v1227 = vsel %vm1225, %v1215, 2102212464
    %v1228 = vsel %vm1224, %v1212, %v1227
    %v1229 = vsel %vm1223, %v1226, %v1228
    %v1230 = vsel %vm1222, %v1209, %v1212
    %v1231 = vsel %vm1225, %v1218, 920167782
    %v1232 = vsel %vm1224, %v1215, %v1231
    %v1233 = vsel %vm1223, %v1230, %v1232
    %v1234 = vsel %vm1222, %v1212, %v1215
    %v1235 = vsel %vm1225, %v1221, 1326507024
    %v1236 = vsel %vm1224, %v1218, %v1235
    %v1237 = vsel %vm1223, %v1234, %v1236
    %v1238 = vshll.u32 %v1198, 8
    %v1239 = vmul.u32.u64.compose %v1238, %v1237
    %v1240 = vextract.low.u32 %v1239
    %v1241 = vextract.high.u32 %v1239
    %v1242 = vmul.u32.u64.compose %v1238, %v1233
    %v1243 = vextract.low.u32 %v1242
    %v1244 = vextract.high.u32 %v1242
    %v1245 = vmul.u32 %v1238, %v1229
    %v1246 = vadd.s32 %v1241, %v1243
    %vm1247 = vc.u32 %v1241, %v1243
    %v1248 = vadd.s32 %v1244, 1
    %v1249 = vsel %vm1247, %v1248, %v1244
    %v1250 = vadd.s32 %v1245, %v1249
    %v1251 = vadd.s32 %v1250, 536870912
    %v1252 = vshrl.u32 %v1251, 30
    %v1253 = vshll.u32 %v1252, 30
    %v1254 = vsub.s32 %v1250, %v1253
    %vm1255 = vcmp.lt.s32.totalorder %v1254, 0
    %v1256 = vsub.s32 0, %v1254
    %v1257 = vsel %vm1255, %v1256, %v1254
    %v1258 = vclz %v1257
    %v1259 = vsub.s32 %v1258, 2
    %vm1260 = vcmp.gt.s32.totalorder 0, %v1259
    %v1261 = vsel %vm1260, 0, %v1259
    %v1262 = vsub.s32 32, %v1261
    %v1263 = vshll.u32 %v1254, %v1261
    %v1264 = vshrl.u32 %v1246, %v1262
    %v1265 = vor.u32 %v1263, %v1264
    %v1266 = vsub.s32 4294967266, %v1261
    %v1267 = vadd.s32 %v1266, 127
    %v1268 = vshll.u32 %v1267, 23
    %v1269 = vor.u32 4788187, %v1268
    %v1270 = vand.u32 2147483647, %v1269
    %v1272 = vcvt.s32.f32 %v1265
    %v1273 = vmul.f32 %v1272, %v1270
    %v1274 = vxor.u32 %v1273, 2147483648
    %v1275 = vsel %vm1192, %v1274, %v1273
    %v1276 = vsub.s32 4, %v1252
    %v1277 = vsel %vm1192, %v1276, %v1252
    %v1278 = vsel %vm1191, %v1189, %v1275
    %v1279 = vsel %vm1191, 0, %v1277
    %v1280 = vcosq.f32.pop %v1278
    %v1281 = vsinq.f32.pop %v1278
    %vm1282 = vweird.f32 %v1189
    %v1283 = vadd.s32 %v1279, 3
    %v1284 = vand.u32 %v1283, 3
    %vm1285 = vcmp.lt.s32.totalorder %v1284, 2
    %vm1286 = vcmp.eq.s32.totalorder %v1284, 0
    %v1287 = vxor.u32 %v1281, 2147483648
    %v1288 = vsel %vm1286, %v1280, %v1287
    %vm1289 = vcmp.eq.s32.totalorder %v1284, 2
    %v1290 = vxor.u32 %v1280, 2147483648
    %v1291 = vsel %vm1289, %v1290, %v1281
    %v1292 = vsel %vm1285, %v1288, %v1291
    %v1293 = vsel %vm1282, nan, %v1292
    %1294 = vst [vmem:[#allocation5 + $0x24] sm:$0x7] %v1293
    // Predicated region
    $region10: #{tpu_custom_call.1} parent=1 // pred_check
      _
    $region11: #{tpu_custom_call.1} parent=1 // pred_check_branch
      %1296 = sbr.rel (0) target = $region13
    $region12: #{tpu_custom_call.1} parent=1 // pred_region
      %s1298 = ssub.s32 640, 640
      %1299 = vsyncadd [#allocation4], %s1298
      %s1300 = sshll.u32 [#allocation5], 4
      %s1301 = int_to_ptr.vmem [resolvable:$true] %s1300
      %1306 = dma.vmem_to_hbm [thread:$0]  %s1301, 640, %s1, [#allocation4], 128, 128, 8
    $region13: #{tpu_custom_call.1} parent=1 // pred_fallthru
      _
    // Predicated region
    $region14: #{tpu_custom_call.1} parent=1 // pred_check
      _
    $region15: #{tpu_custom_call.1} parent=1 // pred_check_branch
      %1308 = sbr.rel (0) target = $region17
    $region16: #{tpu_custom_call.1} parent=1 // pred_region
      %1309 = dma.done [#allocation4], 640
    $region17: #{tpu_custom_call.1} parent=1 // pred_fallthru
      _
    %1310 = vsyncpa [#allocation3], 1
    %1311 = vsyncpa [#allocation4], 1

</llo_original>
